<compile_context>
chip_gen: v5e
topology: v5e:2x2
jax: 0.10.0
libtpu: 0.0.40
codegen_flags: <defaults>
</compile_context>

<pallas_src>
import functools

import jax
import jax.numpy as jnp
from jax import lax
from jax.experimental import pallas as pl
from jax.experimental.pallas import tpu as pltpu


def _round_up(x, m):
    return ((x + m - 1) // m) * m


def _cdiv(a, b):
    return -(-a // b)


def _acl_partials_kernel(in_ref, tgt_ref, out_ref, *, H, W, eps, bc):
    """One grid step = `tb` flattened planes, each an H*W-lane row.

    Writes three per-block partial sums into one dense (8, 128) f32 tile:
      out[0, 0, 0] = sum(t * (p - 1)^2)            (region_in)
      out[0, 0, 1] = sum((1 - t) * p^2)            (region_out)
      out[0, 0, 2] = sum(sqrt(dx^2 + dy^2 + eps))  (contour length)
    mu / lambdaP scaling and the means happen outside the kernel, so the grid
    axis carries no cross-step state and can be marked "parallel".
    """
    p = in_ref[...].astype(jnp.float32)   # (tb, H*W) predictions (f32 in VMEM)
    t = tgt_ref[...].astype(jnp.float32)  # (tb, H*W) targets
    tb, L = p.shape

    # --- ragged-tail mask (only traced when BC % tb != 0) ------------------
    ragged = (bc % tb) != 0
    if ragged:
        plane_idx = (pl.program_id(0) * tb
                     + lax.broadcasted_iota(jnp.int32, (tb, L), 0))
        row_valid = plane_idx < bc            # (tb, L) bool
        p = jnp.where(row_valid, p, 0.0)      # padded planes contribute 0 to
        t = jnp.where(row_valid, t, 0.0)      # the region terms

    # --- region term (lane-dense elementwise, VPU); shared subexpressions --
    #   t*(p-1)^2 = t*p^2 - 2*t*p + t        (1-t)*p^2 = p^2 - t*p^2
    p2 = p * p
    tp2 = t * p2
    region_in = jnp.sum(tp2 - 2.0 * (t * p) + t)
    region_out = jnp.sum(p2 - tp2)

    # --- length (contour) term ----------------------------------------------
    # Flattened lane m = i*W + j of a plane:
    #   dx[m] = t[i+2, j] - t[i+1, j]  ->  lanes m + 2W and m + W
    #   dy[m] = t[i, j+2] - t[i, j+1]  ->  lanes m + 2  and m + 1
    # Valid output region: i <= H-3  (m < (H-2)*W, i.e. the slice bound)
    #                  and j <= W-3  (column mask below).
    M = (H - 2) * W
    dx = t[:, 2 * W:2 * W + M] - t[:, W:W + M]     # (tb, M)
    dy = t[:, 2:2 + M] - t[:, 1:1 + M]             # (tb, M)
    col = lax.broadcasted_iota(jnp.int32, (tb, M), 1) % W
    valid = col <= (W - 3)
    if ragged:
        valid = valid & row_valid[:, :M]           # drop padded planes' sqrt(eps)
    # squares are already non-negative -> no abs() needed
    length = jnp.sum(jnp.where(valid, jnp.sqrt(dx * dx + dy * dy + eps), 0.0))

    # --- pack the three scalars into a dense (8, 128) output tile -----------
    sub = lax.broadcasted_iota(jnp.int32, (8, 128), 0)
    lane = lax.broadcasted_iota(jnp.int32, (8, 128), 1)
    r0 = sub == 0
    tile = jnp.where(r0 & (lane == 0), region_in, 0.0)
    tile = tile + jnp.where(r0 & (lane == 1), region_out, 0.0)
    tile = tile + jnp.where(r0 & (lane == 2), length, 0.0)
    out_ref[0] = tile


def active_contour_loss(inputs, targets, lambdaP=1.0, mu=1.0, eps=1e-8,
                        *, target_block_bytes=4 << 20,
                        vmem_budget_bytes=40 << 20):
    B, C, H, W = inputs.shape
    assert targets.shape == inputs.shape, "inputs/targets shape mismatch"
    assert H >= 3 and W >= 3, "ActiveContourLoss requires H >= 3 and W >= 3"
    BC = B * C
    L = H * W

    # Lane-dense layout: flatten each plane into one H*W-lane row.  The
    # reshape is metadata-only; the f32 cast happens inside the kernel so
    # narrow dtypes DMA at their native width.
    inputs_r = inputs.reshape(BC, L)
    targets_r = targets.reshape(BC, L)

    # ---- planes per block (tb), sized on the PADDED VMEM footprint --------
    in_item = jnp.dtype(inputs.dtype).itemsize
    tg_item = jnp.dtype(targets.dtype).itemsize
    lane_pad = _round_up(L, 128)
    # one input's block bytes per plane (what each DMA moves / buffers hold)
    plane_dma = lane_pad * max(in_item, tg_item)
    # total footprint per plane: 2 pipeline buffers per input + ~6 f32 temps
    plane_vmem = (2 * (in_item + tg_item) + 6 * 4) * lane_pad

    if BC <= 8:
        # Tiny batch: a single block whose sublane dim equals the array dim
        # (any smaller tb would violate the (8, 128) block-shape rule).
        tb = BC
    else:
        # (a) ~target_block_bytes input blocks, (b) footprint under budget,
        # (c) tb a multiple of 8, (d) >= 2 grid steps so both v7x TCs work.
        k_fit = max(1, min(target_block_bytes // plane_dma,
                           vmem_budget_bytes // plane_vmem) // 8)
        k_two = max(1, BC // 16)
        tb = 8 * min(k_fit, k_two)
    num_blocks = _cdiv(BC, tb)

    kernel = functools.partial(_acl_partials_kernel, H=H, W=W, eps=eps, bc=BC)

    cost = pl.CostEstimate(
        flops=14 * BC * H * W,
        transcendentals=BC * (H - 2) * W,
        bytes_accessed=BC * L * (in_item + tg_item) + num_blocks * 8 * 128 * 4,
    )

    partials = pl.pallas_call(
        kernel,
        out_shape=jax.ShapeDtypeStruct((num_blocks, 8, 128), jnp.float32),
        grid=(num_blocks,),
        in_specs=[
            pl.BlockSpec((tb, L), lambda i: (i, 0)),
            pl.BlockSpec((tb, L), lambda i: (i, 0)),
        ],
        out_specs=pl.BlockSpec((1, 8, 128), lambda i: (i, 0, 0)),
        compiler_params=pltpu.CompilerParams(
            dimension_semantics=("parallel",),
            vmem_limit_bytes=48 * 1024 * 1024,
        ),
        cost_estimate=cost,
    )(inputs_r, targets_r)

    region_in_sum = jnp.sum(partials[:, 0, 0])
    region_out_sum = jnp.sum(partials[:, 0, 1])
    length_sum = jnp.sum(partials[:, 0, 2])

    # PyTorch: region_l = (mu*region_in + region_out).sum() * lambdaP (scalar),
    #          lenth.mean() over shape (B, C, H-2).
    region_l = lambdaP * (mu * region_in_sum + region_out_sum)
    length_mean = length_sum / (BC * (H - 2))
    return region_l + length_mean


def _reference_loss(inputs, targets, lambdaP=1.0, mu=1.0, eps=1e-8):
    """Pure-JAX transcription of the PyTorch forward for verification."""
    x = targets[:, :, 1:, :] - targets[:, :, :-1, :]
    y = targets[:, :, :, 1:] - targets[:, :, :, :-1]
    delta_x = x[:, :, 1:, :-2] ** 2
    delta_y = y[:, :, :-2, 1:] ** 2
    delta_u = jnp.abs(delta_x + delta_y)
    lenth = jnp.sqrt(delta_u + eps).sum(-1)
    p = inputs.reshape(-1)
    t = targets.reshape(-1)
    region_in = t * (p - 1.0) ** 2
    region_out = (1.0 - t) * p ** 2
    region_l = (mu * region_in + region_out).sum(-1) * lambdaP
    return region_l.mean() + lenth.mean()


if __name__ == "__main__":
    def _run_case(B, C, H, W, key):
        k1, k2 = jax.random.split(key)
        inputs = jax.random.uniform(k1, (B, C, H, W), dtype=jnp.float32)
        # binary-ish segmentation targets
        targets = (jax.random.uniform(k2, (B, C, H, W)) > 0.5).astype(jnp.float32)
        loss = jax.block_until_ready(active_contour_loss(inputs, targets))
        ref = jax.block_until_ready(_reference_loss(inputs, targets))
        assert jnp.allclose(loss, ref, rtol=1e-4, atol=1e-5), (B, C, H, W, loss, ref)

    key = jax.random.PRNGKey(0)
    ka, kb = jax.random.split(key)
    # BC = 16 -> two "parallel" grid steps of 8 dense planes each (v7x path).
    _run_case(2, 8, 16, 16, ka)
    # BC = 8 -> tiny-batch single-block path (original spec shape).
    _run_case(2, 4, 16, 16, kb)
    print("KERNEL_OK")
</pallas_src>

<mosaic_0001>
module attributes {stable_mosaic.version = 11 : i64} {
  func.func @_acl_partials_kernel(%arg0: i32, %arg1: memref<8x256xf32, #tpu.memory_space<vmem>>, %arg2: memref<8x256xf32, #tpu.memory_space<vmem>>, %arg3: memref<1x8x128xf32, #tpu.memory_space<vmem>>) attributes {dimension_semantics = [#tpu.dimension_semantics<parallel>], iteration_bounds = array<i64: 2>, scalar_prefetch = 0 : i64, scratch_operands = 0 : i64, tpu.core_type = #tpu.core_type<tc>, window_params = [{transform_indices = @transform_0, window_bounds = array<i64: 8, 256>}, {transform_indices = @transform_1, window_bounds = array<i64: 8, 256>}, {transform_indices = @transform_2, window_bounds = array<i64: 1, 8, 128>}]} {
    %c0 = arith.constant 0 : index
    %c0_0 = arith.constant 0 : index
    %0 = vector.load %arg1[%c0, %c0_0] : memref<8x256xf32, #tpu.memory_space<vmem>>, vector<8x256xf32>
    %c0_1 = arith.constant 0 : index
    %c0_2 = arith.constant 0 : index
    %1 = vector.load %arg2[%c0_1, %c0_2] : memref<8x256xf32, #tpu.memory_space<vmem>>, vector<8x256xf32>
    %2 = arith.mulf %0, %0 : vector<8x256xf32>
    %3 = arith.mulf %1, %2 : vector<8x256xf32>
    %4 = arith.mulf %1, %0 : vector<8x256xf32>
    %cst = arith.constant 2.000000e+00 : f32
    %5 = vector.broadcast %cst : f32 to vector<8x256xf32>
    %6 = arith.mulf %5, %4 : vector<8x256xf32>
    %7 = arith.subf %3, %6 : vector<8x256xf32>
    %8 = arith.addf %7, %1 : vector<8x256xf32>
    %9 = vector.shape_cast %8 : vector<8x256xf32> to vector<1x8x256xf32>
    %cst_3 = arith.constant dense<0.000000e+00> : vector<1xf32>
    %10 = vector.multi_reduction <add>, %9, %cst_3 [1, 2] : vector<1x8x256xf32> to vector<1xf32>
    %11 = vector.shape_cast %10 : vector<1xf32> to vector<1x1x1xf32>
    %12 = vector.extract %11[0, 0, 0] : f32 from vector<1x1x1xf32>
    %13 = arith.subf %2, %3 : vector<8x256xf32>
    %14 = vector.shape_cast %13 : vector<8x256xf32> to vector<1x8x256xf32>
    %cst_4 = arith.constant dense<0.000000e+00> : vector<1xf32>
    %15 = vector.multi_reduction <add>, %14, %cst_4 [1, 2] : vector<1x8x256xf32> to vector<1xf32>
    %16 = vector.shape_cast %15 : vector<1xf32> to vector<1x1x1xf32>
    %17 = vector.extract %16[0, 0, 0] : f32 from vector<1x1x1xf32>
    %18 = vector.extract_strided_slice %1 {offsets = [0, 32], sizes = [8, 224], strides = [1, 1]} : vector<8x256xf32> to vector<8x224xf32>
    %19 = vector.extract_strided_slice %1 {offsets = [0, 16], sizes = [8, 224], strides = [1, 1]} : vector<8x256xf32> to vector<8x224xf32>
    %20 = arith.subf %18, %19 : vector<8x224xf32>
    %21 = vector.extract_strided_slice %1 {offsets = [0, 2], sizes = [8, 224], strides = [1, 1]} : vector<8x256xf32> to vector<8x224xf32>
    %22 = vector.extract_strided_slice %1 {offsets = [0, 1], sizes = [8, 224], strides = [1, 1]} : vector<8x256xf32> to vector<8x224xf32>
    %23 = arith.subf %21, %22 : vector<8x224xf32>
    %24 = tpu.iota {dimensions = array<i32: 1>} : vector<8x224xi32>
    %c16_i32 = arith.constant 16 : i32
    %c0_i32 = arith.constant 0 : i32
    %25 = arith.cmpi eq, %c16_i32, %c0_i32 : i32
    %c1_i32 = arith.constant 1 : i32
    %26 = arith.select %25, %c1_i32, %c16_i32 : i32
    %27 = vector.broadcast %26 : i32 to vector<8x224xi32>
    %28 = arith.remsi %24, %27 : vector<8x224xi32>
    %c0_i32_5 = arith.constant 0 : i32
    %29 = vector.broadcast %c0_i32_5 : i32 to vector<8x224xi32>
    %30 = arith.cmpi ne, %28, %29 : vector<8x224xi32>
    %c0_i32_6 = arith.constant 0 : i32
    %31 = vector.broadcast %c0_i32_6 : i32 to vector<8x224xi32>
    %32 = arith.cmpi slt, %28, %31 : vector<8x224xi32>
    %c0_i32_7 = arith.constant 0 : i32
    %33 = arith.cmpi slt, %26, %c0_i32_7 : i32
    %34 = vector.broadcast %33 : i1 to vector<8x224xi1>
    %35 = vector.broadcast %34 : vector<8x224xi1> to vector<8x224xi1>
    %36 = arith.xori %32, %35 : vector<8x224xi1>
    %37 = arith.andi %36, %30 : vector<8x224xi1>
    %38 = vector.broadcast %26 : i32 to vector<8x224xi32>
    %39 = arith.addi %28, %38 : vector<8x224xi32>
    %40 = arith.select %37, %39, %28 : vector<8x224xi1>, vector<8x224xi32>
    %c13_i32 = arith.constant 13 : i32
    %41 = vector.broadcast %c13_i32 : i32 to vector<8x224xi32>
    %42 = arith.cmpi sle, %40, %41 : vector<8x224xi32>
    %43 = arith.mulf %20, %20 : vector<8x224xf32>
    %44 = arith.mulf %23, %23 : vector<8x224xf32>
    %45 = arith.addf %43, %44 : vector<8x224xf32>
    %cst_8 = arith.constant 9.99999993E-9 : f32
    %46 = vector.broadcast %cst_8 : f32 to vector<8x224xf32>
    %47 = arith.addf %45, %46 : vector<8x224xf32>
    %48 = math.sqrt %47 : vector<8x224xf32>
    %cst_9 = arith.constant 0.000000e+00 : f32
    %49 = vector.broadcast %cst_9 : f32 to vector<8x224xf32>
    %50 = arith.select %42, %48, %49 : vector<8x224xi1>, vector<8x224xf32>
    %51 = vector.shape_cast %50 : vector<8x224xf32> to vector<1x8x224xf32>
    %cst_10 = arith.constant dense<0.000000e+00> : vector<1xf32>
    %52 = vector.multi_reduction <add>, %51, %cst_10 [1, 2] : vector<1x8x224xf32> to vector<1xf32>
    %53 = vector.shape_cast %52 : vector<1xf32> to vector<1x1x1xf32>
    %54 = vector.extract %53[0, 0, 0] : f32 from vector<1x1x1xf32>
    %55 = tpu.iota {dimensions = array<i32: 0>} : vector<8x128xi32>
    %56 = tpu.iota {dimensions = array<i32: 1>} : vector<8x128xi32>
    %c0_i32_11 = arith.constant 0 : i32
    %57 = vector.broadcast %c0_i32_11 : i32 to vector<8x128xi32>
    %58 = arith.cmpi eq, %55, %57 : vector<8x128xi32>
    %c0_i32_12 = arith.constant 0 : i32
    %59 = vector.broadcast %c0_i32_12 : i32 to vector<8x128xi32>
    %60 = arith.cmpi eq, %56, %59 : vector<8x128xi32>
    %61 = arith.andi %58, %60 : vector<8x128xi1>
    %cst_13 = arith.constant 0.000000e+00 : f32
    %62 = vector.broadcast %12 : f32 to vector<8x128xf32>
    %63 = vector.broadcast %cst_13 : f32 to vector<8x128xf32>
    %64 = arith.select %61, %62, %63 : vector<8x128xi1>, vector<8x128xf32>
    %c1_i32_14 = arith.constant 1 : i32
    %65 = vector.broadcast %c1_i32_14 : i32 to vector<8x128xi32>
    %66 = arith.cmpi eq, %56, %65 : vector<8x128xi32>
    %67 = arith.andi %58, %66 : vector<8x128xi1>
    %cst_15 = arith.constant 0.000000e+00 : f32
    %68 = vector.broadcast %17 : f32 to vector<8x128xf32>
    %69 = vector.broadcast %cst_15 : f32 to vector<8x128xf32>
    %70 = arith.select %67, %68, %69 : vector<8x128xi1>, vector<8x128xf32>
    %71 = arith.addf %64, %70 : vector<8x128xf32>
    %c2_i32 = arith.constant 2 : i32
    %72 = vector.broadcast %c2_i32 : i32 to vector<8x128xi32>
    %73 = arith.cmpi eq, %56, %72 : vector<8x128xi32>
    %74 = arith.andi %58, %73 : vector<8x128xi1>
    %cst_16 = arith.constant 0.000000e+00 : f32
    %75 = vector.broadcast %54 : f32 to vector<8x128xf32>
    %76 = vector.broadcast %cst_16 : f32 to vector<8x128xf32>
    %77 = arith.select %74, %75, %76 : vector<8x128xi1>, vector<8x128xf32>
    %78 = arith.addf %71, %77 : vector<8x128xf32>
    %c0_17 = arith.constant 0 : index
    %c0_18 = arith.constant 0 : index
    %c0_19 = arith.constant 0 : index
    %79 = vector.load %arg3[%c0_17, %c0_18, %c0_19] : memref<1x8x128xf32, #tpu.memory_space<vmem>>, vector<1x8x128xf32>
    %80 = vector.shape_cast %79 : vector<1x8x128xf32> to vector<8x128xf32>
    %81 = vector.shape_cast %78 : vector<8x128xf32> to vector<1x8x128xf32>
    tpu.vector_store %arg3[%c0_17, %c0_18, %c0_19], %81 {strides = array<i32>} : memref<1x8x128xf32, #tpu.memory_space<vmem>>, vector<1x8x128xf32>,
    return
  }
  func.func @transform_0(%arg0: i32) -> (i32, i32) {
    %c0_i32 = arith.constant 0 : i32
    %c0_i32_0 = arith.constant 0 : i32
    return %arg0, %c0_i32 : i32, i32
  }
  func.func @transform_1(%arg0: i32) -> (i32, i32) {
    %c0_i32 = arith.constant 0 : i32
    %c0_i32_0 = arith.constant 0 : i32
    return %arg0, %c0_i32 : i32, i32
  }
  func.func @transform_2(%arg0: i32) -> (i32, i32, i32) {
    %c0_i32 = arith.constant 0 : i32
    %c0_i32_0 = arith.constant 0 : i32
    %c0_i32_1 = arith.constant 0 : i32
    return %arg0, %c0_i32, %c0_i32_0 : i32, i32, i32
  }
}

</mosaic_0001>

<llo_original>
// kernel: tpu_custom_call.1
$region0: #{tpu_custom_call.1}
  #allocation0 [shape = 'u32[]', space=smem, size = 0x4, offset = 0x4, fixed_abs, tag = 'smem constant byte address 0x4 - core index']
  #allocation1 [shape = 'u32[72,128]{1,0:T(1,128)}', space=vmem, size = 0x9000, scoped, tag = 'internal scratch']
  %s0 = inlined_call_operand.hbm [shape: f32[16,256], index: 0, kind: input, shape index: {}]
  %s1 = inlined_call_operand.hbm [shape: f32[16,256], index: 1, kind: input, shape index: {}]
  %s2 = inlined_call_operand.hbm [shape: f32[2,8,128], index: 2, kind: output, shape index: {}]
  %s3 = sld [smem:[#allocation0]]
  $region49: #{tpu_custom_call.1} parent=0
    _
  %s5 = ssub.s32 1, %s3
  %s6 = scalar_select 0, %s5, %s3
  $region1: #{tpu_custom_call.1} parent=0
    #allocation2 [shape = 'u8[16384]{0}', space=vmem, size = 0x4000, scoped, tag = 'input window, operand 0']
    #allocation3 [shape = 's32[2]{0}', space=sflag, size = 0x8, scoped, tag = 'scoped memory for tpu_custom_call.1']
    #allocation4 [shape = 's32[2]{0}', space=sflag, size = 0x8, scoped, tag = 'scoped memory for tpu_custom_call.1']
    #allocation5 [shape = 'u8[16384]{0}', space=vmem, size = 0x4000, scoped, tag = 'input window, operand 1']
    #allocation6 [shape = 's32[2]{0}', space=sflag, size = 0x8, scoped, tag = 'scoped memory for tpu_custom_call.1']
    #allocation7 [shape = 'u8[8192]{0}', space=vmem, size = 0x2000, scoped, tag = 'output window, operand 0']
    %7 = vsyncpa [#allocation3], 0
    %s8 = scalar_lea.sflag [#allocation3], 1
    %9 = vsyncpa %s8, 0
    %10 = vsyncpa [#allocation6], 0
    %s11 = scalar_lea.sflag [#allocation6], 1
    %12 = vsyncpa %s11, 0
    %13 = vsyncpa [#allocation4], 0
    %s14 = scalar_lea.sflag [#allocation4], 1
    %15 = vsyncpa %s14, 0
    loop: start=0, step=1, limit=4
    $region2: #{tpu_custom_call.1} parent=1 // loop_pre_header
      _
    $region3: #{tpu_custom_call.1} parent=1 // loop_header
      %s17 = sphi 0, %s21
      %p18 = scmp.ge.s32.totalorder %s17, 4
      %s27 = sphi 0, %s29
      %s30 = sphi 0, %s27
      %s31 = sphi 0, %s30
      %s47 = sphi 0, %s31
      %s53 = sphi 0, %s55
      %s56 = sphi 0, %s53
      %s57 = sphi 0, %s56
      %s73 = sphi 0, %s57
      %s79 = sphi 0, %s81
      %s82 = sphi 0, %s79
      %s83 = sphi 0, %s82
      %s99 = sphi 0, %s83
    $region4: #{tpu_custom_call.1} parent=1 // loop_header_branch
      %20 = sbr.rel (%p18) target = $region8
    $region5: #{tpu_custom_call.1} parent=1 // loop_body
      %s22 = ssub.s32 %s17, 1
      %s23 = ssub.s32 %s17, 2
      %s24 = sadd.s32 %s17, 1
      %s25 = ssub.s32 %s17, %s24
      %p26 = scmp.eq.s32.totalorder %s25, 0
      %s28 = sadd.s32 %s27, 1
      %s29 = scalar_select %p26, %s27, %s28
      %p32 = pneg %p26
      %p33 = scmp.eq.s32.totalorder %s17, 1
      %p34 = por %p32, %p33
      %p35 = scmp.ne.s32.totalorder %s27, %s30
      %p36 = scmp.eq.s32.totalorder %s17, 0
      %p37 = por %p35, %p36
      %p38 = scmp.ne.s32.totalorder %s27, %s30
      %p39 = scmp.eq.s32.totalorder %s22, 1
      %p40 = por %p38, %p39
      %p41 = scmp.ne.s32.totalorder %s30, %s31
      %p42 = scmp.eq.s32.totalorder %s22, 0
      %p43 = por %p41, %p42
      %p44 = scmp.ne.s32.totalorder %s30, %s31
      %p45 = scmp.eq.s32.totalorder %s23, 1
      %p46 = por %p44, %p45
      %p48 = scmp.ne.s32.totalorder %s31, %s47
      %p49 = scmp.eq.s32.totalorder %s23, 0
      %p50 = por %p48, %p49
      %s51 = ssub.s32 %s17, %s24
      %p52 = scmp.eq.s32.totalorder %s51, 0
      %s54 = sadd.s32 %s53, 1
      %s55 = scalar_select %p52, %s53, %s54
      %p58 = pneg %p52
      %p59 = scmp.eq.s32.totalorder %s17, 1
      %p60 = por %p58, %p59
      %p61 = scmp.ne.s32.totalorder %s53, %s56
      %p62 = scmp.eq.s32.totalorder %s17, 0
      %p63 = por %p61, %p62
      %p64 = scmp.ne.s32.totalorder %s53, %s56
      %p65 = scmp.eq.s32.totalorder %s22, 1
      %p66 = por %p64, %p65
      %p67 = scmp.ne.s32.totalorder %s56, %s57
      %p68 = scmp.eq.s32.totalorder %s22, 0
      %p69 = por %p67, %p68
      %p70 = scmp.ne.s32.totalorder %s56, %s57
      %p71 = scmp.eq.s32.totalorder %s23, 1
      %p72 = por %p70, %p71
      %p74 = scmp.ne.s32.totalorder %s57, %s73
      %p75 = scmp.eq.s32.totalorder %s23, 0
      %p76 = por %p74, %p75
      %s77 = ssub.s32 %s17, %s24
      %p78 = scmp.eq.s32.totalorder %s77, 0
      %s80 = sadd.s32 %s79, 1
      %s81 = scalar_select %p78, %s79, %s80
      %p84 = pneg %p78
      %p85 = scmp.eq.s32.totalorder %s17, 1
      %p86 = por %p84, %p85
      %p87 = scmp.ne.s32.totalorder %s79, %s82
      %p88 = scmp.eq.s32.totalorder %s17, 0
      %p89 = por %p87, %p88
      %p90 = scmp.ne.s32.totalorder %s79, %s82
      %p91 = scmp.eq.s32.totalorder %s22, 1
      %p92 = por %p90, %p91
      %p93 = scmp.ne.s32.totalorder %s82, %s83
      %p94 = scmp.eq.s32.totalorder %s22, 0
      %p95 = por %p93, %p94
      %p96 = scmp.ne.s32.totalorder %s82, %s83
      %p97 = scmp.eq.s32.totalorder %s23, 1
      %p98 = por %p96, %p97
      %p100 = scmp.ne.s32.totalorder %s83, %s99
      %p101 = scmp.eq.s32.totalorder %s23, 0
      %p102 = por %p100, %p101
      %p103 = scmp.le.s32.totalorder 1, %s17
      %p104 = scmp.lt.s32.totalorder %s17, 3
      %p105 = pnand %p103, %p104
      %p106 = pneg %p105
      // Predicated region
      $region9: #{tpu_custom_call.1} parent=5 // pred_check
        _
      $region10: #{tpu_custom_call.1} parent=5 // pred_check_branch
        %108 = sbr.rel (%p105) target = $region12
      $region11: #{tpu_custom_call.1} parent=5 // pred_region
        %s109 = ssub.s32 %s17, 1
      $region12: #{tpu_custom_call.1} parent=5 // pred_fallthru
        _
      %p110 = scmp.lt.s32.totalorder %s17, 2
      // Predicated region
      $region13: #{tpu_custom_call.1} parent=5 // pred_check
        %p111 = pneg %p110
      $region14: #{tpu_custom_call.1} parent=5 // pred_check_branch
        %113 = sbr.rel (%p111) target = $region16
      $region15: #{tpu_custom_call.1} parent=5 // pred_region
        // Predicated region
        $region17: #{tpu_custom_call.1} parent=15 // pred_check
          %p114 = pneg %p37
        $region18: #{tpu_custom_call.1} parent=15 // pred_check_branch
          %116 = sbr.rel (%p114) target = $region20
        $region19: #{tpu_custom_call.1} parent=15 // pred_region
          %s117 = sand.u32 %s27, 1
          %s118 = scalar_lea.sflag [#allocation3], %s117
          %s119 = sand.u32 %s27, 1
          %s120 = smul.addr %s119, 16
          %s121 = scalar_lea.vmem [#allocation2], %s120
          %123 = vsyncadd %s118, 0
          %s124 = smul.addr %s17, 2
          %s125 = smul.addr %s124, 8
          %s126 = scalar_lea.hbm %s0, %s125
          %s128 = sshll.u32 %s126, 4
          %s129 = int_to_ptr.hbm [resolvable:$true] %s128
          %s130 = sshll.u32 %s121, 4
          %s131 = int_to_ptr.vmem [resolvable:$true] %s130
          %133 = dma.hbm_to_vmem [thread:$0]  %s129, 256, %s131, %s118
        $region20: #{tpu_custom_call.1} parent=15 // pred_fallthru
          _
        // Predicated region
        $region21: #{tpu_custom_call.1} parent=15 // pred_check
          %p134 = pneg %p63
        $region22: #{tpu_custom_call.1} parent=15 // pred_check_branch
          %136 = sbr.rel (%p134) target = $region24
        $region23: #{tpu_custom_call.1} parent=15 // pred_region
          %s137 = sand.u32 %s53, 1
          %s138 = scalar_lea.sflag [#allocation6], %s137
          %s139 = sand.u32 %s53, 1
          %s140 = smul.addr %s139, 16
          %s141 = scalar_lea.vmem [#allocation5], %s140
          %143 = vsyncadd %s138, 0
          %s144 = smul.addr %s17, 2
          %s145 = smul.addr %s144, 8
          %s146 = scalar_lea.hbm %s1, %s145
          %s148 = sshll.u32 %s146, 4
          %s149 = int_to_ptr.hbm [resolvable:$true] %s148
          %s150 = sshll.u32 %s141, 4
          %s151 = int_to_ptr.vmem [resolvable:$true] %s150
          %153 = dma.hbm_to_vmem [thread:$0]  %s149, 256, %s151, %s138
        $region24: #{tpu_custom_call.1} parent=15 // pred_fallthru
          _
      $region16: #{tpu_custom_call.1} parent=5 // pred_fallthru
        _
      %p154 = scmp.le.s32.totalorder 1, %s17
      %p155 = scmp.lt.s32.totalorder %s17, 3
      %p156 = pnand %p154, %p155
      %p157 = pneg %p156
      // Predicated region
      $region25: #{tpu_custom_call.1} parent=5 // pred_check
        _
      $region26: #{tpu_custom_call.1} parent=5 // pred_check_branch
        %159 = sbr.rel (%p156) target = $region28
      $region27: #{tpu_custom_call.1} parent=5 // pred_region
        %s160 = ssub.s32 %s17, 1
        %s161 = sand.u32 %s30, 1
        %s162 = scalar_lea.sflag [#allocation3], %s161
        %s163 = sand.u32 %s30, 1
        %s164 = smul.addr %s163, 16
        %s165 = scalar_lea.vmem [#allocation2], %s164
        // Predicated region
        $region29: #{tpu_custom_call.1} parent=27 // pred_check
          %p166 = pneg %p43
        $region30: #{tpu_custom_call.1} parent=27 // pred_check_branch
          %168 = sbr.rel (%p166) target = $region32
        $region31: #{tpu_custom_call.1} parent=27 // pred_region
          %170 = dma.done %s162, 256
        $region32: #{tpu_custom_call.1} parent=27 // pred_fallthru
          _
        %s171 = sand.u32 %s56, 1
        %s172 = scalar_lea.sflag [#allocation6], %s171
        %s173 = sand.u32 %s56, 1
        %s174 = smul.addr %s173, 16
        %s175 = scalar_lea.vmem [#allocation5], %s174
        // Predicated region
        $region33: #{tpu_custom_call.1} parent=27 // pred_check
          %p176 = pneg %p69
        $region34: #{tpu_custom_call.1} parent=27 // pred_check_branch
          %178 = sbr.rel (%p176) target = $region36
        $region35: #{tpu_custom_call.1} parent=27 // pred_region
          %180 = dma.done %s172, 256
        $region36: #{tpu_custom_call.1} parent=27 // pred_fallthru
          _
        %s181 = sand.u32 %s30, 1
        %s182 = scalar_lea.sflag [#allocation3], %s181
        %s183 = sand.u32 %s30, 1
        %s184 = smul.addr %s183, 16
        %s185 = scalar_lea.vmem [#allocation2], %s184
        %p186 = pneg %p43
        %p187 = pneg %p40
        %s188 = sand.u32 %s56, 1
        %s189 = scalar_lea.sflag [#allocation6], %s188
        %s190 = sand.u32 %s56, 1
        %s191 = smul.addr %s190, 16
        %s192 = scalar_lea.vmem [#allocation5], %s191
        %p193 = pneg %p69
        %p194 = pneg %p66
        %p195 = pneg %p95
        %p196 = pneg %p92
        %s197 = sand.u32 %s82, 1
        %s198 = scalar_lea.sflag [#allocation4], %s197
        %s199 = sand.u32 %s82, 1
        %s200 = smul.addr %s199, 8
        %s201 = scalar_lea.vmem [#allocation7], %s200
        %v202 = vld [vmem:[%s165] sm:$0xff]
        %v203 = vld [vmem:[%s165 + $0x8] sm:$0xff]
        %v204 = vld [vmem:[%s175] sm:$0xff]
        %v205 = vld [vmem:[%s175 + $0x8] sm:$0xff]
        %v206 = vmul.f32 %v202, %v202
        %v207 = vmul.f32 %v203, %v203
        %v208 = vmul.f32 %v204, %v206
        %v209 = vmul.f32 %v205, %v207
        %v210 = vmul.f32 %v204, %v202
        %v211 = vmul.f32 %v205, %v203
        %v212 = vmul.f32 %v210, 2.0
        %v213 = vmul.f32 %v211, 2.0
        %v214 = vsub.f32 %v208, %v212
        %v215 = vsub.f32 %v209, %v213
        %v216 = vadd.f32 %v214, %v204
        %v217 = vadd.f32 %v215, %v205
        %v218 = vadd.f32 %v216, %v217
        %219 = vadd.xlane.f32.xlu0 %v218
        %v220 = vpop.xlane.xlu0 %219
        %v221 = vrot.slane %v220, 4
        %v222 = vadd.f32 %v220, %v221
        %v223 = vrot.slane %v222, 2
        %v224 = vadd.f32 %v222, %v223
        %v225 = vrot.slane %v224, 1
        %v226 = vadd.f32 %v224, %v225
        %s227 = vtos %v226
        %v228 = vsub.f32 %v206, %v208
        %v229 = vsub.f32 %v207, %v209
        %v230 = vadd.f32 %v228, %v229
        %231 = vadd.xlane.f32.xlu0 %v230
        %v232 = vpop.xlane.xlu0 %231
        %v233 = vrot.slane %v232, 4
        %v234 = vadd.f32 %v232, %v233
        %v235 = vrot.slane %v234, 2
        %v236 = vadd.f32 %v234, %v235
        %v237 = vrot.slane %v236, 1
        %v238 = vadd.f32 %v236, %v237
        %s239 = vtos %v238
        %242 = vrot.lane.b32.xlu0 %v204, 16
        %v243 = vpop.permute.xlu0 %242
        %244 = vrot.lane.b32.xlu0 %v205, 16
        %v245 = vpop.permute.xlu0 %244
        %vm246 = vcmask 130048
        %v247 = vsel %vm246, %v243, %v245
        %v250 = vsub.f32 %v204, %v243
        %v251 = vsub.f32 %v205, %v247
        %252 = vrot.lane.b32.xlu0 %v204, 1
        %v253 = vpop.permute.xlu0 %252
        %254 = vrot.lane.b32.xlu0 %v205, 1
        %v255 = vpop.permute.xlu0 %254
        %vm256 = vcmask 7168
        %v257 = vsel %vm256, %v253, %v255
        %v260 = vsub.f32 %v204, %v253
        %v261 = vsub.f32 %v205, %v257
        %v262 = vlaneseq
        %v263 = vand.u32 %v262, 127
        %v264 = vadd.s32 %v263, 128
        %vm265 = vcmp.lt.s32.totalorder %v263, 0
        %v266 = vsub.s32 0, %v263
        %v267 = vsel %vm265, %v266, %v263
        %v268 = vshrl.u32 %v267, 4
        %v269 = vand.u32 %v267, 15
        %v270 = vsub.s32 0, %v269
        %v271 = vsel %vm265, %v270, %v269
        %vm272 = vcmp.lt.s32.totalorder %v264, 0
        %v273 = vsub.s32 0, %v264
        %v274 = vsel %vm272, %v273, %v264
        %v275 = vshrl.u32 %v274, 4
        %v276 = vand.u32 %v274, 15
        %v277 = vsub.s32 0, %v276
        %v278 = vsel %vm272, %v277, %v276
        %vm279 = vcmp.ne.s32.totalorder %v271, 0
        %vm280 = vcmp.ne.s32.totalorder %v278, 0
        %vm281 = vcmp.lt.s32.totalorder %v271, 0
        %vm282 = vcmp.lt.s32.totalorder %v278, 0
        %vm283 = vmand %vm281, %vm279
        %vm284 = vmand %vm282, %vm280
        %v285 = vadd.s32 %v271, 16
        %v286 = vadd.s32 %v278, 16
        %v287 = vsel %vm283, %v285, %v271
        %v288 = vsel %vm284, %v286, %v278
        %vm289 = vcmp.le.s32.totalorder %v287, 13
        %vm290 = vcmp.le.s32.totalorder %v288, 13
        %v291 = vmul.f32 %v250, %v250
        %v292 = vmul.f32 %v251, %v251
        %v293 = vmul.f32 %v260, %v260
        %v294 = vmul.f32 %v261, %v261
        %297 = vrot.lane.b32.xlu0 %v293, 30
        %v298 = vpop.permute.xlu0 %297
        %299 = vrot.lane.b32.xlu0 %v294, 30
        %v300 = vpop.permute.xlu0 %299
        %vm301 = vcmask 244736
        %v302 = vsel %vm301, %v298, %v300
        %v305 = vadd.f32 %v291, %v298
        %v306 = vadd.f32 %v292, %v302
        %v307 = vadd.f32 %v305, 1e-08
        %v308 = vadd.f32 %v306, 1e-08
        %v309 = vrsqrt.pop %v307
        %v310 = vmul.f32 %v309, %v307
        %v311 = vmul.f32 %v310, %v309
        %v312 = vmul.f32 0.5, %v311
        %v313 = vsub.f32 1.5, %v312
        %v314 = vmul.f32 %v309, %v313
        %v315 = vmul.f32 %v307, %v314
        %vm316 = vcmp.eq.f32.partialorder %v307, inf
        %v317 = vsel %vm316, %v307, %v315
        %vm318 = vcmp.eq.f32.partialorder %v307, 0.0
        %v319 = vand.u32 %v307, 2147483648
        %v320 = vsel %vm318, %v319, %v317
        %v321 = vrsqrt.pop %v308
        %v322 = vmul.f32 %v321, %v308
        %v323 = vmul.f32 %v322, %v321
        %v324 = vmul.f32 0.5, %v323
        %v325 = vsub.f32 1.5, %v324
        %v326 = vmul.f32 %v321, %v325
        %v327 = vmul.f32 %v308, %v326
        %vm328 = vcmp.eq.f32.partialorder %v308, inf
        %v329 = vsel %vm328, %v308, %v327
        %vm330 = vcmp.eq.f32.partialorder %v308, 0.0
        %v331 = vand.u32 %v308, 2147483648
        %v332 = vsel %vm330, %v331, %v329
        %335 = vrot.lane.b32.xlu0 %v320, 96
        %v336 = vpop.permute.xlu0 %335
        %337 = vrot.lane.b32.xlu0 %v332, 96
        %v338 = vpop.permute.xlu0 %337
        %vm339 = vcmask 785408
        %v340 = vsel %vm339, %v336, %v338
        %v343 = vsel %vm289, %v340, 0.0
        %v344 = vsel %vm290, %v338, 0.0
        %v345 = vsel %vm339, %v344, 0.0
        %v346 = vadd.f32 %v343, %v345
        %347 = vadd.xlane.f32.xlu0 %v346
        %v348 = vpop.xlane.xlu0 %347
        %v349 = vrot.slane %v348, 4
        %v350 = vadd.f32 %v348, %v349
        %v351 = vrot.slane %v350, 2
        %v352 = vadd.f32 %v350, %v351
        %v353 = vrot.slane %v352, 1
        %v354 = vadd.f32 %v352, %v353
        %s355 = vtos %v354
        %v356 = vlaneseq
        %v357 = vshrl.u32 %v356, 7
        %vm358 = vcmp.eq.s32.totalorder %v357, 0
        %vm359 = vcmp.eq.s32.totalorder %v263, 0
        %vm360 = vmand %vm358, %vm359
        %v361 = vstv %s227
        %v362 = vsel %vm360, %v361, 0.0
        %vm363 = vcmp.eq.s32.totalorder %v263, 1
        %vm364 = vmand %vm358, %vm363
        %v365 = vstv %s239
        %v366 = vsel %vm364, %v365, 0.0
        %v367 = vadd.f32 %v362, %v366
        %vm368 = vcmp.eq.s32.totalorder %v263, 2
        %vm369 = vmand %vm358, %vm368
        %v370 = vstv %s355
        %v371 = vsel %vm369, %v370, 0.0
        %v372 = vadd.f32 %v367, %v371
        %373 = vst [vmem:[%s201] sm:$0xff] %v372
        %s374 = sand.u32 %s82, 1
        %s375 = scalar_lea.sflag [#allocation4], %s374
        %s376 = sand.u32 %s82, 1
        %s377 = smul.addr %s376, 8
        %s378 = scalar_lea.vmem [#allocation7], %s377
        // Predicated region
        $region37: #{tpu_custom_call.1} parent=27 // pred_check
          %p379 = pneg %p92
        $region38: #{tpu_custom_call.1} parent=27 // pred_check_branch
          %381 = sbr.rel (%p379) target = $region40
        $region39: #{tpu_custom_call.1} parent=27 // pred_region
          %383 = vsyncadd %s375, 0
          %s384 = smul.addr %s22, 8
          %s385 = scalar_lea.hbm %s2, %s384
          %s387 = sshll.u32 %s378, 4
          %s388 = int_to_ptr.vmem [resolvable:$true] %s387
          %s389 = sshll.u32 %s385, 4
          %s390 = int_to_ptr.hbm [resolvable:$true] %s389
          %392 = dma.vmem_to_hbm [thread:$0]  %s388, 128, %s390, %s375
        $region40: #{tpu_custom_call.1} parent=27 // pred_fallthru
          _
      $region28: #{tpu_custom_call.1} parent=5 // pred_fallthru
        _
      %p393 = scmp.le.s32.totalorder 2, %s17
      // Predicated region
      $region41: #{tpu_custom_call.1} parent=5 // pred_check
        %p394 = pneg %p393
      $region42: #{tpu_custom_call.1} parent=5 // pred_check_branch
        %396 = sbr.rel (%p394) target = $region44
      $region43: #{tpu_custom_call.1} parent=5 // pred_region
        %s397 = ssub.s32 %s17, 2
        // Predicated region
        $region45: #{tpu_custom_call.1} parent=43 // pred_check
          %p398 = pneg %p98
        $region46: #{tpu_custom_call.1} parent=43 // pred_check_branch
          %400 = sbr.rel (%p398) target = $region48
        $region47: #{tpu_custom_call.1} parent=43 // pred_region
          %s401 = sand.u32 %s83, 1
          %s402 = scalar_lea.sflag [#allocation4], %s401
          %s403 = sand.u32 %s83, 1
          %s404 = smul.addr %s403, 8
          %s405 = scalar_lea.vmem [#allocation7], %s404
          %407 = dma.done %s402, 128
        $region48: #{tpu_custom_call.1} parent=43 // pred_fallthru
          _
      $region44: #{tpu_custom_call.1} parent=5 // pred_fallthru
        _
    $region6: #{tpu_custom_call.1} parent=1 // loop_footer
      %s21 = sadd.s32 1, %s17
    $region7: #{tpu_custom_call.1} parent=1 // loop_footer_branch
      %16 = sbr.rel target = $region3
    $region8: #{tpu_custom_call.1} parent=1 // loop_exit
      _
    %408 = vsyncpa [#allocation3], 1
    %s409 = scalar_lea.sflag [#allocation3], 1
    %410 = vsyncpa %s409, 1
    %411 = vsyncpa [#allocation6], 1
    %s412 = scalar_lea.sflag [#allocation6], 1
    %413 = vsyncpa %s412, 1
    %414 = vsyncpa [#allocation4], 1
    %s415 = scalar_lea.sflag [#allocation4], 1
    %416 = vsyncpa %s415, 1

</llo_original>
